<compile_context>
chip_gen: v7x
topology: tpu7x:2x2x1
jax: 0.10.0
libtpu: 0.0.40
codegen_flags: <defaults>
</compile_context>

<pallas_src>
import functools

import jax
import jax.numpy as jnp
from jax.experimental import pallas as pl
from jax.experimental.pallas import tpu as pltpu

# Deterministic "buffer" values (module __init__ registers gamma / lmbda).
GAMMA = 0.99
LMBDA = 0.95


def _gae_kernel(reward_ref, term_ref, value_ref, next_value_ref,
                adv_ref, ret_ref, *, gamma, lmbda):
    """Refs are batch-major (TB, T) blocks: batch on sublanes, time on lanes."""
    T = reward_ref.shape[1]

    # ---- Full-block elementwise precompute (VPU, lane/sublane dense). ----
    not_done = 1.0 - term_ref[...].astype(jnp.float32)
    # b_t = delta_t
    adv_ref[...] = (reward_ref[...].astype(jnp.float32)
                    + gamma * next_value_ref[...].astype(jnp.float32) * not_done
                    - value_ref[...].astype(jnp.float32))
    # a_t = coeff_t
    ret_ref[...] = (gamma * lmbda) * not_done

    # ---- Associative suffix scan of affine maps f_t(x) = a_t * x + b_t ----
    #   gae_t = (f_t o f_{t+1} o ... o f_{T-1})(0)
    # Hillis–Steele: after ceil(log2 T) full-block passes, adv_ref holds gae_t.
    # Elements with t + d >= T compose with the identity map, i.e. they stay
    # unchanged, so each pass only rewrites the first (T - d) time columns.
    # All loads below are issued before the overlapping stores, so the
    # in-place update is exact.
    d = 1
    while d < T:
        w = T - d
        a_lo = ret_ref[:, :w]     # a_t        (t < w)
        a_sh = ret_ref[:, d:]     # a_{t+d}
        b_lo = adv_ref[:, :w]     # b_t
        b_sh = adv_ref[:, d:]     # b_{t+d}
        adv_ref[:, :w] = b_lo + a_lo * b_sh
        ret_ref[:, :w] = a_lo * a_sh
        d *= 2

    # ---- returns = advantages + value: one full-block pass. ----
    ret_ref[...] = adv_ref[...] + value_ref[...].astype(jnp.float32)


def _pick_batch_tile(B, T, max_block_bytes=(6 << 20) // 12):
    """Largest sublane-aligned batch tile that divides B, fits the per-block
    VMEM budget (12 double-buffered blocks ~<= 6 MiB), and — when possible —
    leaves >= 2 grid steps so both TensorCores / the DMA pipeline stay busy."""
    cands = [c for c in (4096, 2048, 1024, 512, 256, 128, 64, 32, 16, 8)
             if c <= B and B % c == 0]
    if not cands:
        return B
    for need_multi in (True, False):
        for c in cands:                       # descending: prefer bigger tiles
            if need_multi and B // c < 2:
                continue
            if c * T * 4 <= max_block_bytes:
                return c
    return cands[-1]


def gae_pallas(reward, terminated, value, next_value, gamma=GAMMA, lmbda=LMBDA):
    """reward/terminated/value/next_value: [B, T] -> (advantages, returns) f32 [B, T]."""
    B, T = reward.shape

    # Keep terminated narrow on the wire; the kernel up-casts in VMEM.
    if terminated.dtype == jnp.bool_:
        terminated = terminated.astype(jnp.int8)

    # Pad batch to a multiple of 8 (sublane rule) so tiling stays uniform.
    pad = (-B) % 8
    if pad:
        padfn = lambda x: jnp.pad(x, ((0, pad), (0, 0)))
        reward, terminated, value, next_value = map(
            padfn, (reward, terminated, value, next_value))
    Bp = B + pad

    TB = _pick_batch_tile(Bp, T)
    nb = Bp // TB
    block_bytes = TB * T * 4

    spec = pl.BlockSpec((TB, T), lambda i: (i, 0))
    kernel = functools.partial(_gae_kernel, gamma=float(gamma), lmbda=float(lmbda))

    adv, ret = pl.pallas_call(
        kernel,
        out_shape=(jax.ShapeDtypeStruct((Bp, T), jnp.float32),
                   jax.ShapeDtypeStruct((Bp, T), jnp.float32)),
        grid_spec=pltpu.PrefetchScalarGridSpec(
            num_scalar_prefetch=0,
            grid=(nb,),
            in_specs=[spec, spec, spec, spec],
            out_specs=(spec, spec),
        ),
        compiler_params=pltpu.CompilerParams(
            dimension_semantics=("parallel",),
            vmem_limit_bytes=int(min(64 << 20, max(24 << 20, 24 * block_bytes))),
        ),
    )(reward, terminated, value, next_value)

    if pad:
        adv, ret = adv[:B], ret[:B]
    return adv, ret


def gae_reference(reward, terminated, value, next_value, gamma=GAMMA, lmbda=LMBDA):
    """Pure-JAX reference mirroring the PyTorch loop."""
    B, T = reward.shape
    not_done = 1.0 - terminated.astype(jnp.float32)
    adv_cols = [None] * T
    gae = jnp.zeros((B,), jnp.float32)
    for step in reversed(range(T)):
        delta = (reward[:, step]
                 + gamma * next_value[:, step] * not_done[:, step]
                 - value[:, step])
        gae = delta + gamma * lmbda * not_done[:, step] * gae
        adv_cols[step] = gae
    adv = jnp.stack(adv_cols, axis=1)
    return adv, adv + value


if __name__ == "__main__":
    key = jax.random.PRNGKey(0)
    B, T = 8, 16  # batch, num_steps
    k1, k2, k3, k4 = jax.random.split(key, 4)

    reward = jax.random.normal(k1, (B, T), dtype=jnp.float32)
    terminated = (jax.random.uniform(k2, (B, T)) < 0.1).astype(jnp.float32)
    value = jax.random.normal(k3, (B, T), dtype=jnp.float32)
    next_value = jax.random.normal(k4, (B, T), dtype=jnp.float32)

    adv, ret = gae_pallas(reward, terminated, value, next_value)
    adv = jax.block_until_ready(adv)
    ret = jax.block_until_ready(ret)

    adv_ref, ret_ref = gae_reference(reward, terminated, value, next_value)
    assert jnp.allclose(adv, adv_ref, atol=2e-5, rtol=2e-5)
    assert jnp.allclose(ret, ret_ref, atol=2e-5, rtol=2e-5)

    print("KERNEL_OK")
</pallas_src>

<mosaic_0001>
module attributes {stable_mosaic.version = 11 : i64} {
  func.func @_gae_kernel(%arg0: i32, %arg1: memref<8x16xf32, #tpu.memory_space<vmem>>, %arg2: memref<8x16xf32, #tpu.memory_space<vmem>>, %arg3: memref<8x16xf32, #tpu.memory_space<vmem>>, %arg4: memref<8x16xf32, #tpu.memory_space<vmem>>, %arg5: memref<8x16xf32, #tpu.memory_space<vmem>>, %arg6: memref<8x16xf32, #tpu.memory_space<vmem>>) attributes {dimension_semantics = [#tpu.dimension_semantics<parallel>], iteration_bounds = array<i64: 1>, scalar_prefetch = 0 : i64, scratch_operands = 0 : i64, tpu.core_type = #tpu.core_type<tc>, window_params = [{transform_indices = @transform_0, window_bounds = array<i64: 8, 16>}, {transform_indices = @transform_1, window_bounds = array<i64: 8, 16>}, {transform_indices = @transform_2, window_bounds = array<i64: 8, 16>}, {transform_indices = @transform_3, window_bounds = array<i64: 8, 16>}, {transform_indices = @transform_4, window_bounds = array<i64: 8, 16>}, {transform_indices = @transform_5, window_bounds = array<i64: 8, 16>}]} {
    %c0 = arith.constant 0 : index
    %c0_0 = arith.constant 0 : index
    %0 = vector.load %arg2[%c0, %c0_0] : memref<8x16xf32, #tpu.memory_space<vmem>>, vector<8x16xf32>
    %cst = arith.constant 1.000000e+00 : f32
    %1 = vector.broadcast %cst : f32 to vector<8x16xf32>
    %2 = arith.subf %1, %0 : vector<8x16xf32>
    %c0_1 = arith.constant 0 : index
    %c0_2 = arith.constant 0 : index
    %3 = vector.load %arg1[%c0_1, %c0_2] : memref<8x16xf32, #tpu.memory_space<vmem>>, vector<8x16xf32>
    %c0_3 = arith.constant 0 : index
    %c0_4 = arith.constant 0 : index
    %4 = vector.load %arg4[%c0_3, %c0_4] : memref<8x16xf32, #tpu.memory_space<vmem>>, vector<8x16xf32>
    %cst_5 = arith.constant 9.900000e-01 : f32
    %5 = vector.broadcast %cst_5 : f32 to vector<8x16xf32>
    %6 = arith.mulf %5, %4 : vector<8x16xf32>
    %7 = arith.mulf %6, %2 : vector<8x16xf32>
    %8 = arith.addf %3, %7 : vector<8x16xf32>
    %c0_6 = arith.constant 0 : index
    %c0_7 = arith.constant 0 : index
    %9 = vector.load %arg3[%c0_6, %c0_7] : memref<8x16xf32, #tpu.memory_space<vmem>>, vector<8x16xf32>
    %10 = arith.subf %8, %9 : vector<8x16xf32>
    %c0_8 = arith.constant 0 : index
    %c0_9 = arith.constant 0 : index
    %11 = vector.load %arg5[%c0_8, %c0_9] : memref<8x16xf32, #tpu.memory_space<vmem>>, vector<8x16xf32>
    tpu.vector_store %arg5[%c0_8, %c0_9], %10 {strides = array<i32>} : memref<8x16xf32, #tpu.memory_space<vmem>>, vector<8x16xf32>,
    %cst_10 = arith.constant 9.405000e-01 : f32
    %12 = vector.broadcast %cst_10 : f32 to vector<8x16xf32>
    %13 = arith.mulf %12, %2 : vector<8x16xf32>
    %c0_11 = arith.constant 0 : index
    %c0_12 = arith.constant 0 : index
    %14 = vector.load %arg6[%c0_11, %c0_12] : memref<8x16xf32, #tpu.memory_space<vmem>>, vector<8x16xf32>
    tpu.vector_store %arg6[%c0_11, %c0_12], %13 {strides = array<i32>} : memref<8x16xf32, #tpu.memory_space<vmem>>, vector<8x16xf32>,
    %c0_13 = arith.constant 0 : index
    %c0_14 = arith.constant 0 : index
    %15 = vector.load %arg6[%c0_13, %c0_14] : memref<8x16xf32, #tpu.memory_space<vmem>>, vector<8x15xf32>
    %c0_15 = arith.constant 0 : index
    %c1 = arith.constant 1 : index
    %16 = vector.load %arg6[%c0_15, %c1] : memref<8x16xf32, #tpu.memory_space<vmem>>, vector<8x15xf32>
    %c0_16 = arith.constant 0 : index
    %c0_17 = arith.constant 0 : index
    %17 = vector.load %arg5[%c0_16, %c0_17] : memref<8x16xf32, #tpu.memory_space<vmem>>, vector<8x15xf32>
    %c0_18 = arith.constant 0 : index
    %c1_19 = arith.constant 1 : index
    %18 = vector.load %arg5[%c0_18, %c1_19] : memref<8x16xf32, #tpu.memory_space<vmem>>, vector<8x15xf32>
    %19 = arith.mulf %15, %18 : vector<8x15xf32>
    %20 = arith.addf %17, %19 : vector<8x15xf32>
    %c0_20 = arith.constant 0 : index
    %c0_21 = arith.constant 0 : index
    %21 = vector.load %arg5[%c0_20, %c0_21] : memref<8x16xf32, #tpu.memory_space<vmem>>, vector<8x15xf32>
    tpu.vector_store %arg5[%c0_20, %c0_21], %20 {strides = array<i32>} : memref<8x16xf32, #tpu.memory_space<vmem>>, vector<8x15xf32>,
    %22 = arith.mulf %15, %16 : vector<8x15xf32>
    %c0_22 = arith.constant 0 : index
    %c0_23 = arith.constant 0 : index
    %23 = vector.load %arg6[%c0_22, %c0_23] : memref<8x16xf32, #tpu.memory_space<vmem>>, vector<8x15xf32>
    tpu.vector_store %arg6[%c0_22, %c0_23], %22 {strides = array<i32>} : memref<8x16xf32, #tpu.memory_space<vmem>>, vector<8x15xf32>,
    %c0_24 = arith.constant 0 : index
    %c0_25 = arith.constant 0 : index
    %24 = vector.load %arg6[%c0_24, %c0_25] : memref<8x16xf32, #tpu.memory_space<vmem>>, vector<8x14xf32>
    %c0_26 = arith.constant 0 : index
    %c2 = arith.constant 2 : index
    %25 = vector.load %arg6[%c0_26, %c2] : memref<8x16xf32, #tpu.memory_space<vmem>>, vector<8x14xf32>
    %c0_27 = arith.constant 0 : index
    %c0_28 = arith.constant 0 : index
    %26 = vector.load %arg5[%c0_27, %c0_28] : memref<8x16xf32, #tpu.memory_space<vmem>>, vector<8x14xf32>
    %c0_29 = arith.constant 0 : index
    %c2_30 = arith.constant 2 : index
    %27 = vector.load %arg5[%c0_29, %c2_30] : memref<8x16xf32, #tpu.memory_space<vmem>>, vector<8x14xf32>
    %28 = arith.mulf %24, %27 : vector<8x14xf32>
    %29 = arith.addf %26, %28 : vector<8x14xf32>
    %c0_31 = arith.constant 0 : index
    %c0_32 = arith.constant 0 : index
    %30 = vector.load %arg5[%c0_31, %c0_32] : memref<8x16xf32, #tpu.memory_space<vmem>>, vector<8x14xf32>
    tpu.vector_store %arg5[%c0_31, %c0_32], %29 {strides = array<i32>} : memref<8x16xf32, #tpu.memory_space<vmem>>, vector<8x14xf32>,
    %31 = arith.mulf %24, %25 : vector<8x14xf32>
    %c0_33 = arith.constant 0 : index
    %c0_34 = arith.constant 0 : index
    %32 = vector.load %arg6[%c0_33, %c0_34] : memref<8x16xf32, #tpu.memory_space<vmem>>, vector<8x14xf32>
    tpu.vector_store %arg6[%c0_33, %c0_34], %31 {strides = array<i32>} : memref<8x16xf32, #tpu.memory_space<vmem>>, vector<8x14xf32>,
    %c0_35 = arith.constant 0 : index
    %c0_36 = arith.constant 0 : index
    %33 = vector.load %arg6[%c0_35, %c0_36] : memref<8x16xf32, #tpu.memory_space<vmem>>, vector<8x12xf32>
    %c0_37 = arith.constant 0 : index
    %c4 = arith.constant 4 : index
    %34 = vector.load %arg6[%c0_37, %c4] : memref<8x16xf32, #tpu.memory_space<vmem>>, vector<8x12xf32>
    %c0_38 = arith.constant 0 : index
    %c0_39 = arith.constant 0 : index
    %35 = vector.load %arg5[%c0_38, %c0_39] : memref<8x16xf32, #tpu.memory_space<vmem>>, vector<8x12xf32>
    %c0_40 = arith.constant 0 : index
    %c4_41 = arith.constant 4 : index
    %36 = vector.load %arg5[%c0_40, %c4_41] : memref<8x16xf32, #tpu.memory_space<vmem>>, vector<8x12xf32>
    %37 = arith.mulf %33, %36 : vector<8x12xf32>
    %38 = arith.addf %35, %37 : vector<8x12xf32>
    %c0_42 = arith.constant 0 : index
    %c0_43 = arith.constant 0 : index
    %39 = vector.load %arg5[%c0_42, %c0_43] : memref<8x16xf32, #tpu.memory_space<vmem>>, vector<8x12xf32>
    tpu.vector_store %arg5[%c0_42, %c0_43], %38 {strides = array<i32>} : memref<8x16xf32, #tpu.memory_space<vmem>>, vector<8x12xf32>,
    %40 = arith.mulf %33, %34 : vector<8x12xf32>
    %c0_44 = arith.constant 0 : index
    %c0_45 = arith.constant 0 : index
    %41 = vector.load %arg6[%c0_44, %c0_45] : memref<8x16xf32, #tpu.memory_space<vmem>>, vector<8x12xf32>
    tpu.vector_store %arg6[%c0_44, %c0_45], %40 {strides = array<i32>} : memref<8x16xf32, #tpu.memory_space<vmem>>, vector<8x12xf32>,
    %c0_46 = arith.constant 0 : index
    %c0_47 = arith.constant 0 : index
    %42 = vector.load %arg6[%c0_46, %c0_47] : memref<8x16xf32, #tpu.memory_space<vmem>>, vector<8x8xf32>
    %c0_48 = arith.constant 0 : index
    %c8 = arith.constant 8 : index
    %43 = vector.load %arg6[%c0_48, %c8] : memref<8x16xf32, #tpu.memory_space<vmem>>, vector<8x8xf32>
    %c0_49 = arith.constant 0 : index
    %c0_50 = arith.constant 0 : index
    %44 = vector.load %arg5[%c0_49, %c0_50] : memref<8x16xf32, #tpu.memory_space<vmem>>, vector<8x8xf32>
    %c0_51 = arith.constant 0 : index
    %c8_52 = arith.constant 8 : index
    %45 = vector.load %arg5[%c0_51, %c8_52] : memref<8x16xf32, #tpu.memory_space<vmem>>, vector<8x8xf32>
    %46 = arith.mulf %42, %45 : vector<8x8xf32>
    %47 = arith.addf %44, %46 : vector<8x8xf32>
    %c0_53 = arith.constant 0 : index
    %c0_54 = arith.constant 0 : index
    %48 = vector.load %arg5[%c0_53, %c0_54] : memref<8x16xf32, #tpu.memory_space<vmem>>, vector<8x8xf32>
    tpu.vector_store %arg5[%c0_53, %c0_54], %47 {strides = array<i32>} : memref<8x16xf32, #tpu.memory_space<vmem>>, vector<8x8xf32>,
    %49 = arith.mulf %42, %43 : vector<8x8xf32>
    %c0_55 = arith.constant 0 : index
    %c0_56 = arith.constant 0 : index
    %50 = vector.load %arg6[%c0_55, %c0_56] : memref<8x16xf32, #tpu.memory_space<vmem>>, vector<8x8xf32>
    tpu.vector_store %arg6[%c0_55, %c0_56], %49 {strides = array<i32>} : memref<8x16xf32, #tpu.memory_space<vmem>>, vector<8x8xf32>,
    %c0_57 = arith.constant 0 : index
    %c0_58 = arith.constant 0 : index
    %51 = vector.load %arg5[%c0_57, %c0_58] : memref<8x16xf32, #tpu.memory_space<vmem>>, vector<8x16xf32>
    %c0_59 = arith.constant 0 : index
    %c0_60 = arith.constant 0 : index
    %52 = vector.load %arg3[%c0_59, %c0_60] : memref<8x16xf32, #tpu.memory_space<vmem>>, vector<8x16xf32>
    %53 = arith.addf %51, %52 : vector<8x16xf32>
    %c0_61 = arith.constant 0 : index
    %c0_62 = arith.constant 0 : index
    %54 = vector.load %arg6[%c0_61, %c0_62] : memref<8x16xf32, #tpu.memory_space<vmem>>, vector<8x16xf32>
    tpu.vector_store %arg6[%c0_61, %c0_62], %53 {strides = array<i32>} : memref<8x16xf32, #tpu.memory_space<vmem>>, vector<8x16xf32>,
    return
  }
  func.func @transform_0(%arg0: i32) -> (i32, i32) {
    %c0_i32 = arith.constant 0 : i32
    %c0_i32_0 = arith.constant 0 : i32
    return %arg0, %c0_i32 : i32, i32
  }
  func.func @transform_1(%arg0: i32) -> (i32, i32) {
    %c0_i32 = arith.constant 0 : i32
    %c0_i32_0 = arith.constant 0 : i32
    return %arg0, %c0_i32 : i32, i32
  }
  func.func @transform_2(%arg0: i32) -> (i32, i32) {
    %c0_i32 = arith.constant 0 : i32
    %c0_i32_0 = arith.constant 0 : i32
    return %arg0, %c0_i32 : i32, i32
  }
  func.func @transform_3(%arg0: i32) -> (i32, i32) {
    %c0_i32 = arith.constant 0 : i32
    %c0_i32_0 = arith.constant 0 : i32
    return %arg0, %c0_i32 : i32, i32
  }
  func.func @transform_4(%arg0: i32) -> (i32, i32) {
    %c0_i32 = arith.constant 0 : i32
    %c0_i32_0 = arith.constant 0 : i32
    return %arg0, %c0_i32 : i32, i32
  }
  func.func @transform_5(%arg0: i32) -> (i32, i32) {
    %c0_i32 = arith.constant 0 : i32
    %c0_i32_0 = arith.constant 0 : i32
    return %arg0, %c0_i32 : i32, i32
  }
}

</mosaic_0001>

<llo_original>
// kernel: tpu_custom_call.1
$region0: #{tpu_custom_call.1}
  #allocation0 [shape = 'u32[]', space=smem, size = 0x4, offset = 0x4, fixed_abs, tag = 'smem constant byte address 0x4 - core index']
  #allocation1 [shape = 'u32[144,128]{1,0:T(1,128)}', space=vmem, size = 0x12000, scoped, tag = 'internal scratch']
  %s0 = inlined_call_operand.hbm [shape: f32[8,16], index: 0, kind: input, shape index: {}]
  %s1 = inlined_call_operand.hbm [shape: f32[8,16], index: 1, kind: input, shape index: {}]
  %s2 = inlined_call_operand.hbm [shape: f32[8,16], index: 2, kind: input, shape index: {}]
  %s3 = inlined_call_operand.vmem [shape: f32[8,16], index: 3, kind: input, shape index: {}]
  %s4 = inlined_call_operand.hbm [shape: f32[8,16], index: 4, kind: output, shape index: {0}]
  %s5 = inlined_call_operand.hbm [shape: f32[8,16], index: 5, kind: output, shape index: {1}]
  %6 = xla_tuple %s4, %s5
  %s7 = sld [smem:[#allocation0]]
  $region46: #{tpu_custom_call.1} parent=0
    _
  %s9 = ssub.s32 1, %s7
  %s10 = scalar_select 0, %s9, %s7
  $region1: #{tpu_custom_call.1} parent=0
    #allocation2 [shape = 'u8[4096]{0}', space=vmem, size = 0x1000, scoped, tag = 'input window, operand 0, single buffered']
    #allocation3 [shape = 's32[1]{0}', space=sflag, size = 0x4, scoped, tag = 'scoped memory for tpu_custom_call.1']
    #allocation4 [shape = 's32[1]{0}', space=sflag, size = 0x4, scoped, tag = 'scoped memory for tpu_custom_call.1']
    #allocation5 [shape = 'u8[4096]{0}', space=vmem, size = 0x1000, scoped, tag = 'input window, operand 1, single buffered']
    #allocation6 [shape = 's32[1]{0}', space=sflag, size = 0x4, scoped, tag = 'scoped memory for tpu_custom_call.1']
    #allocation7 [shape = 'u8[4096]{0}', space=vmem, size = 0x1000, scoped, tag = 'input window, operand 2, single buffered']
    #allocation8 [shape = 'u8[4096]{0}', space=vmem, size = 0x1000, scoped, tag = 'output window, operand 0, single buffered']
    #allocation9 [shape = 'u8[4096]{0}', space=vmem, size = 0x1000, scoped, tag = 'output window, operand 1, single buffered']
    #allocation10 [shape = 's32[1]{0}', space=sflag, size = 0x4, scoped, tag = 'scoped memory for tpu_custom_call.1']
    %11 = vsyncpa [#allocation3], 0
    %12 = vsyncpa [#allocation6], 0
    %13 = vsyncpa [#allocation4], 0
    %14 = vsyncpa [#allocation10], 0
    // Predicated region
    $region2: #{tpu_custom_call.1} parent=1 // pred_check
      _
    $region3: #{tpu_custom_call.1} parent=1 // pred_check_branch
      %16 = sbr.rel (0) target = $region5
    $region4: #{tpu_custom_call.1} parent=1 // pred_region
      %s18 = ssub.s32 128, 128
      %19 = vsyncadd [#allocation3], %s18
      %s21 = sshll.u32 [#allocation2], 4
      %s22 = int_to_ptr.vmem [resolvable:$true] %s21
      %24 = dma.hbm_to_vmem [thread:$0]  %s0, 128, %s22, [#allocation3]
    $region5: #{tpu_custom_call.1} parent=1 // pred_fallthru
      _
    // Predicated region
    $region6: #{tpu_custom_call.1} parent=1 // pred_check
      _
    $region7: #{tpu_custom_call.1} parent=1 // pred_check_branch
      %26 = sbr.rel (0) target = $region9
    $region8: #{tpu_custom_call.1} parent=1 // pred_region
      %s28 = ssub.s32 128, 128
      %29 = vsyncadd [#allocation6], %s28
      %s31 = sshll.u32 [#allocation5], 4
      %s32 = int_to_ptr.vmem [resolvable:$true] %s31
      %34 = dma.hbm_to_vmem [thread:$0]  %s1, 128, %s32, [#allocation6]
    $region9: #{tpu_custom_call.1} parent=1 // pred_fallthru
      _
    // Predicated region
    $region10: #{tpu_custom_call.1} parent=1 // pred_check
      _
    $region11: #{tpu_custom_call.1} parent=1 // pred_check_branch
      %36 = sbr.rel (0) target = $region13
    $region12: #{tpu_custom_call.1} parent=1 // pred_region
      %s38 = ssub.s32 128, 128
      %39 = vsyncadd [#allocation6], %s38
      %s41 = sshll.u32 [#allocation7], 4
      %s42 = int_to_ptr.vmem [resolvable:$true] %s41
      %44 = dma.hbm_to_vmem [thread:$0]  %s2, 128, %s42, [#allocation6]
    $region13: #{tpu_custom_call.1} parent=1 // pred_fallthru
      _
    // Predicated region
    $region14: #{tpu_custom_call.1} parent=1 // pred_check
      _
    $region15: #{tpu_custom_call.1} parent=1 // pred_check_branch
      %46 = sbr.rel (0) target = $region17
    $region16: #{tpu_custom_call.1} parent=1 // pred_region
      _
    $region17: #{tpu_custom_call.1} parent=1 // pred_fallthru
      _
    // Predicated region
    $region18: #{tpu_custom_call.1} parent=1 // pred_check
      _
    $region19: #{tpu_custom_call.1} parent=1 // pred_check_branch
      %48 = sbr.rel (0) target = $region21
    $region20: #{tpu_custom_call.1} parent=1 // pred_region
      %49 = dma.done [#allocation3], 128
    $region21: #{tpu_custom_call.1} parent=1 // pred_fallthru
      _
    // Predicated region
    $region22: #{tpu_custom_call.1} parent=1 // pred_check
      _
    $region23: #{tpu_custom_call.1} parent=1 // pred_check_branch
      %51 = sbr.rel (0) target = $region25
    $region24: #{tpu_custom_call.1} parent=1 // pred_region
      %52 = dma.done [#allocation6], 128
    $region25: #{tpu_custom_call.1} parent=1 // pred_fallthru
      _
    // Predicated region
    $region26: #{tpu_custom_call.1} parent=1 // pred_check
      _
    $region27: #{tpu_custom_call.1} parent=1 // pred_check_branch
      %54 = sbr.rel (0) target = $region29
    $region28: #{tpu_custom_call.1} parent=1 // pred_region
      %55 = dma.done [#allocation6], 128
    $region29: #{tpu_custom_call.1} parent=1 // pred_fallthru
      _
    %v56 = vld [vmem:[#allocation5] sm:$0xff]
    %v57 = vsub.f32 1.0, %v56
    %v58 = vld [vmem:[#allocation2] sm:$0xff]
    %v59 = vld [vmem:[%s3] sm:$0xff]
    %v60 = vmul.f32 %v59, 0.99
    %v61 = vmul.f32 %v60, %v57
    %v62 = vadd.f32 %v58, %v61
    %v63 = vld [vmem:[#allocation7] sm:$0xff]
    %v64 = vsub.f32 %v62, %v63
    %vm65 = vcmask 130048
    %66 = vst.msk [vmem:[#allocation8] sm:$0xff] %vm65, %v64
    %v67 = vmul.f32 %v57, 0.9405
    %68 = vst.msk [vmem:[#allocation9] sm:$0xff] %vm65, %v67
    %v69 = vld [vmem:[#allocation9] sm:$0xff]
    %v70 = vld [vmem:[#allocation8] sm:$0xff]
    %72 = vrot.lane.b32.xlu0 %v70, 127
    %v73 = vpop.permute.xlu0 %72
    %v75 = vmul.f32 %v69, %v73
    %v76 = vadd.f32 %v70, %v75
    %vm77 = vcmask 121856
    %78 = vst.msk [vmem:[#allocation8] sm:$0xff] %vm77, %v76
    %80 = vrot.lane.b32.xlu0 %v69, 127
    %v81 = vpop.permute.xlu0 %80
    %v83 = vmul.f32 %v69, %v81
    %84 = vst.msk [vmem:[#allocation9] sm:$0xff] %vm77, %v83
    %v85 = vld [vmem:[#allocation9] sm:$0xff]
    %v86 = vld [vmem:[#allocation8] sm:$0xff]
    %88 = vrot.lane.b32.xlu0 %v86, 126
    %v89 = vpop.permute.xlu0 %88
    %v91 = vmul.f32 %v85, %v89
    %v92 = vadd.f32 %v86, %v91
    %vm93 = vcmask 113664
    %94 = vst.msk [vmem:[#allocation8] sm:$0xff] %vm93, %v92
    %96 = vrot.lane.b32.xlu0 %v85, 126
    %v97 = vpop.permute.xlu0 %96
    %v99 = vmul.f32 %v85, %v97
    %100 = vst.msk [vmem:[#allocation9] sm:$0xff] %vm93, %v99
    %v101 = vld [vmem:[#allocation9] sm:$0xff]
    %v102 = vld [vmem:[#allocation8] sm:$0xff]
    %104 = vrot.lane.b32.xlu0 %v102, 124
    %v105 = vpop.permute.xlu0 %104
    %v107 = vmul.f32 %v101, %v105
    %v108 = vadd.f32 %v102, %v107
    %vm109 = vcmask 97280
    %110 = vst.msk [vmem:[#allocation8] sm:$0xff] %vm109, %v108
    %112 = vrot.lane.b32.xlu0 %v101, 124
    %v113 = vpop.permute.xlu0 %112
    %v115 = vmul.f32 %v101, %v113
    %116 = vst.msk [vmem:[#allocation9] sm:$0xff] %vm109, %v115
    %v117 = vld [vmem:[#allocation9] sm:$0xff]
    %v118 = vld [vmem:[#allocation8] sm:$0xff]
    %120 = vrot.lane.b32.xlu0 %v118, 120
    %v121 = vpop.permute.xlu0 %120
    %v123 = vmul.f32 %v117, %v121
    %v124 = vadd.f32 %v118, %v123
    %vm125 = vcmask 64512
    %126 = vst.msk [vmem:[#allocation8] sm:$0xff] %vm125, %v124
    %128 = vrot.lane.b32.xlu0 %v117, 120
    %v129 = vpop.permute.xlu0 %128
    %v131 = vmul.f32 %v117, %v129
    %132 = vst.msk [vmem:[#allocation9] sm:$0xff] %vm125, %v131
    %v133 = vld [vmem:[#allocation8] sm:$0xff]
    %v134 = vld [vmem:[#allocation7] sm:$0xff]
    %v135 = vadd.f32 %v133, %v134
    %136 = vst.msk [vmem:[#allocation9] sm:$0xff] %vm65, %v135
    // Predicated region
    $region30: #{tpu_custom_call.1} parent=1 // pred_check
      _
    $region31: #{tpu_custom_call.1} parent=1 // pred_check_branch
      %138 = sbr.rel (0) target = $region33
    $region32: #{tpu_custom_call.1} parent=1 // pred_region
      %s140 = ssub.s32 128, 128
      %141 = vsyncadd [#allocation4], %s140
      %s143 = sshll.u32 [#allocation8], 4
      %s144 = int_to_ptr.vmem [resolvable:$true] %s143
      %146 = dma.vmem_to_hbm [thread:$0]  %s144, 128, %s4, [#allocation4]
    $region33: #{tpu_custom_call.1} parent=1 // pred_fallthru
      _
    // Predicated region
    $region34: #{tpu_custom_call.1} parent=1 // pred_check
      _
    $region35: #{tpu_custom_call.1} parent=1 // pred_check_branch
      %148 = sbr.rel (0) target = $region37
    $region36: #{tpu_custom_call.1} parent=1 // pred_region
      %s150 = ssub.s32 128, 128
      %151 = vsyncadd [#allocation10], %s150
      %s153 = sshll.u32 [#allocation9], 4
      %s154 = int_to_ptr.vmem [resolvable:$true] %s153
      %156 = dma.vmem_to_hbm [thread:$0]  %s154, 128, %s5, [#allocation10]
    $region37: #{tpu_custom_call.1} parent=1 // pred_fallthru
      _
    // Predicated region
    $region38: #{tpu_custom_call.1} parent=1 // pred_check
      _
    $region39: #{tpu_custom_call.1} parent=1 // pred_check_branch
      %158 = sbr.rel (0) target = $region41
    $region40: #{tpu_custom_call.1} parent=1 // pred_region
      %159 = dma.done [#allocation4], 128
    $region41: #{tpu_custom_call.1} parent=1 // pred_fallthru
      _
    // Predicated region
    $region42: #{tpu_custom_call.1} parent=1 // pred_check
      _
    $region43: #{tpu_custom_call.1} parent=1 // pred_check_branch
      %161 = sbr.rel (0) target = $region45
    $region44: #{tpu_custom_call.1} parent=1 // pred_region
      %162 = dma.done [#allocation10], 128
    $region45: #{tpu_custom_call.1} parent=1 // pred_fallthru
      _
    %163 = vsyncpa [#allocation3], 1
    %164 = vsyncpa [#allocation6], 1
    %165 = vsyncpa [#allocation4], 1
    %166 = vsyncpa [#allocation10], 1

</llo_original>
